<compile_context>
chip_gen: v7x
topology: tpu7x:2x2x1
jax: 0.10.0
libtpu: 0.0.40
codegen_flags: <defaults>
</compile_context>

<pallas_src>
import jax
import jax.numpy as jnp
from jax.experimental import pallas as pl
from jax.experimental.pallas import tpu as pltpu

LANE = 128


def _round_up(n, m):
    return ((n + m - 1) // m) * m


def _pad_axis(a, axis, target):
    pad = target - a.shape[axis]
    if pad <= 0:
        return a
    widths = [(0, 0)] * a.ndim
    widths[axis] = (0, pad)
    return jnp.pad(a, widths)


def grafiti_decoder_kernel(s_ref, x_ref, w1_ref, b1_ref, w2_ref, b2_ref, o_ref):
    """Fused 2-layer Grafiti decoder.

    s_ref : [N, N]     dense propagation matrix (degree/edge-normalized scatter_mean)
    x_ref : [N, Dp]    node features, feature dim zero-padded to a lane multiple
    w*_ref: [Din, Dout] layer weights (stored as x @ W layout), zero-padded
    b*_ref: [1, Dout]   biases, zero-padded
    o_ref : [N, H2p]   lane-dense output
    """
    s = s_ref[...]
    x = x_ref[...]

    # ---- layer 1: aggr = S @ x ; z = (x - aggr) @ W1 + b1 ---------------------
    aggr1 = jnp.dot(s, x, preferred_element_type=jnp.float32)
    z1 = jnp.dot(x - aggr1, w1_ref[...],
                 preferred_element_type=jnp.float32) + b1_ref[...]
    # relu(leaky_relu(z, 0.01)) == relu(z): the negative branch is a scaled
    # negative number that the outer relu clamps to zero, so one max is exact.
    h1 = jnp.maximum(z1, 0.0)

    # ---- layer 2 (S stays resident in VMEM, no HBM round-trip) ----------------
    aggr2 = jnp.dot(s, h1, preferred_element_type=jnp.float32)
    z2 = jnp.dot(h1 - aggr2, w2_ref[...],
                 preferred_element_type=jnp.float32) + b2_ref[...]
    o_ref[...] = jnp.maximum(z2, 0.0)


def build_propagation_matrix(edge_index, edge_attr, num_nodes):
    """Dense S with S @ x == scatter_mean(x[src] / edge_attr / E, dst, dim_size=N)."""
    # TODO(synk): the PyG gather + torch_scatter.scatter_mean (data-dependent
    # scatter) has no clean Pallas equivalent; it is folded into this dense
    # [N, N] matrix with plain JAX one-hot matmuls outside the kernel.
    src, dst = edge_index[0], edge_index[1]
    num_edges = src.shape[0]
    node_ids = jnp.arange(num_nodes)
    one_hot_src = (src[:, None] == node_ids[None, :]).astype(jnp.float32)  # [E, N]
    one_hot_dst = (dst[:, None] == node_ids[None, :]).astype(jnp.float32)  # [E, N]
    inv_w = 1.0 / (edge_attr.astype(jnp.float32) * num_edges)              # [E]
    s_sum = one_hot_dst.T @ (inv_w[:, None] * one_hot_src)                 # [N, N]
    in_deg = one_hot_dst.sum(axis=0)                                       # [N]
    # scatter_mean: divide by in-degree, 0 for nodes with no incoming edges.
    return s_sum / jnp.maximum(in_deg, 1.0)[:, None]


def grafiti_decoder_forward(x, edge_index, edge_attr, w1, b1, w2, b2):
    """x: [N, in_dim] f32, edge_index: [2, E] int32, edge_attr: [E] f32."""
    n, in_dim = x.shape
    h1_dim = w1.shape[1]
    h2_dim = w2.shape[1]

    s = build_propagation_matrix(edge_index, edge_attr, n)

    # Lane-dense zero padding of all feature axes (exact: pads contribute 0).
    dp = max(LANE, _round_up(in_dim, LANE))
    h1p = max(LANE, _round_up(h1_dim, LANE))
    h2p = max(LANE, _round_up(h2_dim, LANE))

    x_p = _pad_axis(x.astype(jnp.float32), 1, dp)
    w1_p = _pad_axis(_pad_axis(w1.astype(jnp.float32), 0, dp), 1, h1p)
    b1_p = _pad_axis(b1.astype(jnp.float32).reshape(1, -1), 1, h1p)
    w2_p = _pad_axis(_pad_axis(w2.astype(jnp.float32), 0, h1p), 1, h2p)
    b2_p = _pad_axis(b2.astype(jnp.float32).reshape(1, -1), 1, h2p)

    vmem = pl.BlockSpec(memory_space=pltpu.MemorySpace.VMEM)
    out = pl.pallas_call(
        grafiti_decoder_kernel,
        out_shape=jax.ShapeDtypeStruct((n, h2p), jnp.float32),
        in_specs=[vmem] * 6,
        out_specs=vmem,
    )(s, x_p, w1_p, b1_p, w2_p, b2_p)
    return out[:, :h2_dim]


def reference_forward(x, edge_index, edge_attr, w1, b1, w2, b2):
    """Pure-JAX reference mirroring the PyTorch module (gather + scatter_mean)."""
    src, dst = edge_index[0], edge_index[1]
    num_nodes = x.shape[0]
    num_edges = src.shape[0]

    def layer(h, w, b):
        msg = h[src] / edge_attr.astype(jnp.float32)[:, None] / num_edges
        agg_sum = jnp.zeros((num_nodes, h.shape[1]), jnp.float32).at[dst].add(msg)
        cnt = jnp.zeros((num_nodes,), jnp.float32).at[dst].add(1.0)
        aggr = agg_sum / jnp.maximum(cnt, 1.0)[:, None]
        z = (h - aggr) @ w + b
        lrelu = jnp.where(z > 0, z, 0.01 * z)   # leaky_relu(0.01)
        return jnp.maximum(lrelu, 0.0)          # .relu()

    h1 = layer(x.astype(jnp.float32), w1, b1)
    return layer(h1, w2, b2)


if __name__ == "__main__":
    key = jax.random.PRNGKey(0)
    k_x, k_src, k_dst, k_attr, k_w1, k_b1, k_w2, k_b2 = jax.random.split(key, 8)

    # Small forward-consistent shapes: 16 nodes, in_dim=32, layers=[30, 30], 48 edges.
    num_nodes, in_dim = 16, 32
    layers = [30, 30]
    num_edges = 48

    x = jax.random.normal(k_x, (num_nodes, in_dim), dtype=jnp.float32)
    src = jax.random.randint(k_src, (num_edges,), 0, num_nodes)
    dst = jax.random.randint(k_dst, (num_edges,), 0, num_nodes)
    edge_index = jnp.stack([src, dst]).astype(jnp.int32)
    # Positive edge attributes (degrees/weights); avoids division by zero as in usage.
    edge_attr = jax.random.uniform(k_attr, (num_edges,), minval=1.0, maxval=3.0)

    w1 = jax.random.normal(k_w1, (in_dim, layers[0]), dtype=jnp.float32) * 0.2
    b1 = jax.random.normal(k_b1, (layers[0],), dtype=jnp.float32) * 0.1
    w2 = jax.random.normal(k_w2, (layers[0], layers[1]), dtype=jnp.float32) * 0.2
    b2 = jax.random.normal(k_b2, (layers[1],), dtype=jnp.float32) * 0.1

    out = grafiti_decoder_forward(x, edge_index, edge_attr, w1, b1, w2, b2)
    out = jax.block_until_ready(out)

    ref = reference_forward(x, edge_index, edge_attr, w1, b1, w2, b2)

    assert out.shape == (num_nodes, layers[1])
    assert jnp.allclose(out, ref, atol=1e-4, rtol=1e-4), float(
        jnp.max(jnp.abs(out - ref)))

    print("KERNEL_OK")
</pallas_src>

<mosaic_0001>
module attributes {stable_mosaic.version = 11 : i64} {
  func.func @grafiti_decoder_kernel(%arg0: memref<16x16xf32, #tpu.memory_space<vmem>>, %arg1: memref<16x128xf32, #tpu.memory_space<vmem>>, %arg2: memref<128x128xf32, #tpu.memory_space<vmem>>, %arg3: memref<1x128xf32, #tpu.memory_space<vmem>>, %arg4: memref<128x128xf32, #tpu.memory_space<vmem>>, %arg5: memref<1x128xf32, #tpu.memory_space<vmem>>, %arg6: memref<16x128xf32, #tpu.memory_space<vmem>>) attributes {dimension_semantics = [], scalar_prefetch = 0 : i64, scratch_operands = 0 : i64, tpu.core_type = #tpu.core_type<tc>} {
    %c0 = arith.constant 0 : index
    %c0_0 = arith.constant 0 : index
    %0 = vector.load %arg0[%c0, %c0_0] : memref<16x16xf32, #tpu.memory_space<vmem>>, vector<16x16xf32>
    %c0_1 = arith.constant 0 : index
    %c0_2 = arith.constant 0 : index
    %1 = vector.load %arg1[%c0_1, %c0_2] : memref<16x128xf32, #tpu.memory_space<vmem>>, vector<16x128xf32>
    %cst = arith.constant dense<0.000000e+00> : vector<16x128xf32>
    %2 = tpu.matmul %0, %1, %cst {dimension_numbers = #tpu.dot_dimension_numbers<[1], [0], [0], [1], [0, 0, 1, 1], [], []>} : vector<16x16xf32>, vector<16x128xf32>, vector<16x128xf32> -> vector<16x128xf32>
    %3 = arith.subf %1, %2 : vector<16x128xf32>
    %c0_3 = arith.constant 0 : index
    %c0_4 = arith.constant 0 : index
    %4 = vector.load %arg2[%c0_3, %c0_4] : memref<128x128xf32, #tpu.memory_space<vmem>>, vector<128x128xf32>
    %cst_5 = arith.constant dense<0.000000e+00> : vector<16x128xf32>
    %5 = tpu.matmul %3, %4, %cst_5 {dimension_numbers = #tpu.dot_dimension_numbers<[1], [0], [0], [1], [0, 0, 1, 1], [], []>} : vector<16x128xf32>, vector<128x128xf32>, vector<16x128xf32> -> vector<16x128xf32>
    %c0_6 = arith.constant 0 : index
    %c0_7 = arith.constant 0 : index
    %6 = vector.load %arg3[%c0_6, %c0_7] : memref<1x128xf32, #tpu.memory_space<vmem>>, vector<1x128xf32>
    %7 = vector.broadcast %6 : vector<1x128xf32> to vector<16x128xf32>
    %8 = arith.addf %5, %7 : vector<16x128xf32>
    %cst_8 = arith.constant 0.000000e+00 : f32
    %9 = vector.broadcast %cst_8 : f32 to vector<16x128xf32>
    %10 = arith.maximumf %8, %9 : vector<16x128xf32>
    %cst_9 = arith.constant dense<0.000000e+00> : vector<16x128xf32>
    %11 = tpu.matmul %0, %10, %cst_9 {dimension_numbers = #tpu.dot_dimension_numbers<[1], [0], [0], [1], [0, 0, 1, 1], [], []>} : vector<16x16xf32>, vector<16x128xf32>, vector<16x128xf32> -> vector<16x128xf32>
    %12 = arith.subf %10, %11 : vector<16x128xf32>
    %c0_10 = arith.constant 0 : index
    %c0_11 = arith.constant 0 : index
    %13 = vector.load %arg4[%c0_10, %c0_11] : memref<128x128xf32, #tpu.memory_space<vmem>>, vector<128x128xf32>
    %cst_12 = arith.constant dense<0.000000e+00> : vector<16x128xf32>
    %14 = tpu.matmul %12, %13, %cst_12 {dimension_numbers = #tpu.dot_dimension_numbers<[1], [0], [0], [1], [0, 0, 1, 1], [], []>} : vector<16x128xf32>, vector<128x128xf32>, vector<16x128xf32> -> vector<16x128xf32>
    %c0_13 = arith.constant 0 : index
    %c0_14 = arith.constant 0 : index
    %15 = vector.load %arg5[%c0_13, %c0_14] : memref<1x128xf32, #tpu.memory_space<vmem>>, vector<1x128xf32>
    %16 = vector.broadcast %15 : vector<1x128xf32> to vector<16x128xf32>
    %17 = arith.addf %14, %16 : vector<16x128xf32>
    %cst_15 = arith.constant 0.000000e+00 : f32
    %18 = vector.broadcast %cst_15 : f32 to vector<16x128xf32>
    %19 = arith.maximumf %17, %18 : vector<16x128xf32>
    %c0_16 = arith.constant 0 : index
    %c0_17 = arith.constant 0 : index
    %20 = vector.load %arg6[%c0_16, %c0_17] : memref<16x128xf32, #tpu.memory_space<vmem>>, vector<16x128xf32>
    tpu.vector_store %arg6[%c0_16, %c0_17], %19 {strides = array<i32>} : memref<16x128xf32, #tpu.memory_space<vmem>>, vector<16x128xf32>,
    return
  }
}

</mosaic_0001>

<llo_original>
// kernel: tpu_custom_call.1
$region0: #{tpu_custom_call.1}
  #allocation0 [shape = 'u32[]', space=smem, size = 0x4, offset = 0x4, fixed_abs, tag = 'smem constant byte address 0x4 - core index']
  #allocation1 [shape = 'u32[144,128]{1,0:T(1,128)}', space=vmem, size = 0x12000, scoped, tag = 'internal scratch']
  %s0 = inlined_call_operand.hbm [shape: f32[16,16], index: 0, kind: input, shape index: {}]
  %s1 = inlined_call_operand.hbm [shape: f32[16,128], index: 1, kind: input, shape index: {}]
  %s2 = inlined_call_operand.hbm [shape: f32[128,128], index: 2, kind: input, shape index: {}]
  %s3 = inlined_call_operand.vmem [shape: f32[1,128], index: 3, kind: input, shape index: {}]
  %s4 = inlined_call_operand.hbm [shape: f32[128,128], index: 4, kind: input, shape index: {}]
  %s5 = inlined_call_operand.vmem [shape: f32[1,128], index: 5, kind: input, shape index: {}]
  %s6 = inlined_call_operand.hbm [shape: f32[16,128], index: 6, kind: output, shape index: {}]
  %s7 = sld [smem:[#allocation0]]
  $region50: #{tpu_custom_call.1} parent=0
    _
  %s9 = ssub.s32 1, %s7
  %s10 = scalar_select 0, %s9, %s7
  $region1: #{tpu_custom_call.1} parent=0
    #allocation2 [shape = 'u8[8192]{0}', space=vmem, size = 0x2000, scoped, tag = 'input window, operand 0, single buffered']
    #allocation3 [shape = 's32[1]{0}', space=sflag, size = 0x4, scoped, tag = 'scoped memory for tpu_custom_call.1']
    #allocation4 [shape = 's32[1]{0}', space=sflag, size = 0x4, scoped, tag = 'scoped memory for tpu_custom_call.1']
    #allocation5 [shape = 'u8[8192]{0}', space=vmem, size = 0x2000, scoped, tag = 'input window, operand 1, single buffered']
    #allocation6 [shape = 's32[1]{0}', space=sflag, size = 0x4, scoped, tag = 'scoped memory for tpu_custom_call.1']
    #allocation7 [shape = 'u8[65536]{0}', space=vmem, size = 0x10000, scoped, tag = 'input window, operand 2, single buffered']
    #allocation8 [shape = 'u8[65536]{0}', space=vmem, size = 0x10000, scoped, tag = 'input window, operand 4, single buffered']
    #allocation9 [shape = 's32[1]{0}', space=sflag, size = 0x4, scoped, tag = 'scoped memory for tpu_custom_call.1']
    #allocation10 [shape = 'u8[8192]{0}', space=vmem, size = 0x2000, scoped, tag = 'output window, operand 0, single buffered']
    %11 = vsyncpa [#allocation3], 0
    %12 = vsyncpa [#allocation6], 0
    %13 = vsyncpa [#allocation9], 0
    %14 = vsyncpa [#allocation4], 0
    // Predicated region
    $region2: #{tpu_custom_call.1} parent=1 // pred_check
      _
    $region3: #{tpu_custom_call.1} parent=1 // pred_check_branch
      %16 = sbr.rel (0) target = $region5
    $region4: #{tpu_custom_call.1} parent=1 // pred_region
      %s18 = ssub.s32 256, 256
      %19 = vsyncadd [#allocation3], %s18
      %s20 = sshll.u32 [#allocation2], 4
      %s21 = int_to_ptr.vmem [resolvable:$true] %s20
      %26 = dma.hbm_to_vmem [thread:$0]  %s0, 256, %s21, [#allocation3], 128, 128, 8
    $region5: #{tpu_custom_call.1} parent=1 // pred_fallthru
      _
    // Predicated region
    $region6: #{tpu_custom_call.1} parent=1 // pred_check
      _
    $region7: #{tpu_custom_call.1} parent=1 // pred_check_branch
      %28 = sbr.rel (0) target = $region9
    $region8: #{tpu_custom_call.1} parent=1 // pred_region
      %s30 = ssub.s32 256, 256
      %31 = vsyncadd [#allocation6], %s30
      %s32 = sshll.u32 [#allocation5], 4
      %s33 = int_to_ptr.vmem [resolvable:$true] %s32
      %38 = dma.hbm_to_vmem [thread:$0]  %s1, 256, %s33, [#allocation6], 128, 128, 8
    $region9: #{tpu_custom_call.1} parent=1 // pred_fallthru
      _
    // Predicated region
    $region10: #{tpu_custom_call.1} parent=1 // pred_check
      _
    $region11: #{tpu_custom_call.1} parent=1 // pred_check_branch
      %40 = sbr.rel (0) target = $region13
    $region12: #{tpu_custom_call.1} parent=1 // pred_region
      %s42 = ssub.s32 2048, 2048
      %43 = vsyncadd [#allocation6], %s42
      %s44 = sshll.u32 [#allocation7], 4
      %s45 = int_to_ptr.vmem [resolvable:$true] %s44
      %50 = dma.hbm_to_vmem [thread:$0]  %s2, 2048, %s45, [#allocation6], 128, 128, 8
    $region13: #{tpu_custom_call.1} parent=1 // pred_fallthru
      _
    // Predicated region
    $region14: #{tpu_custom_call.1} parent=1 // pred_check
      _
    $region15: #{tpu_custom_call.1} parent=1 // pred_check_branch
      %52 = sbr.rel (0) target = $region17
    $region16: #{tpu_custom_call.1} parent=1 // pred_region
      _
    $region17: #{tpu_custom_call.1} parent=1 // pred_fallthru
      _
    // Predicated region
    $region18: #{tpu_custom_call.1} parent=1 // pred_check
      _
    $region19: #{tpu_custom_call.1} parent=1 // pred_check_branch
      %54 = sbr.rel (0) target = $region21
    $region20: #{tpu_custom_call.1} parent=1 // pred_region
      %s56 = ssub.s32 2048, 2048
      %57 = vsyncadd [#allocation9], %s56
      %s58 = sshll.u32 [#allocation8], 4
      %s59 = int_to_ptr.vmem [resolvable:$true] %s58
      %64 = dma.hbm_to_vmem [thread:$0]  %s4, 2048, %s59, [#allocation9], 128, 128, 8
    $region21: #{tpu_custom_call.1} parent=1 // pred_fallthru
      _
    // Predicated region
    $region22: #{tpu_custom_call.1} parent=1 // pred_check
      _
    $region23: #{tpu_custom_call.1} parent=1 // pred_check_branch
      %66 = sbr.rel (0) target = $region25
    $region24: #{tpu_custom_call.1} parent=1 // pred_region
      _
    $region25: #{tpu_custom_call.1} parent=1 // pred_fallthru
      _
    // Predicated region
    $region26: #{tpu_custom_call.1} parent=1 // pred_check
      _
    $region27: #{tpu_custom_call.1} parent=1 // pred_check_branch
      %68 = sbr.rel (0) target = $region29
    $region28: #{tpu_custom_call.1} parent=1 // pred_region
      %69 = dma.done [#allocation3], 256
    $region29: #{tpu_custom_call.1} parent=1 // pred_fallthru
      _
    // Predicated region
    $region30: #{tpu_custom_call.1} parent=1 // pred_check
      _
    $region31: #{tpu_custom_call.1} parent=1 // pred_check_branch
      %71 = sbr.rel (0) target = $region33
    $region32: #{tpu_custom_call.1} parent=1 // pred_region
      %72 = dma.done [#allocation6], 256
    $region33: #{tpu_custom_call.1} parent=1 // pred_fallthru
      _
    // Predicated region
    $region34: #{tpu_custom_call.1} parent=1 // pred_check
      _
    $region35: #{tpu_custom_call.1} parent=1 // pred_check_branch
      %74 = sbr.rel (0) target = $region37
    $region36: #{tpu_custom_call.1} parent=1 // pred_region
      %75 = dma.done [#allocation6], 2048
    $region37: #{tpu_custom_call.1} parent=1 // pred_fallthru
      _
    // Predicated region
    $region38: #{tpu_custom_call.1} parent=1 // pred_check
      _
    $region39: #{tpu_custom_call.1} parent=1 // pred_check_branch
      %77 = sbr.rel (0) target = $region41
    $region40: #{tpu_custom_call.1} parent=1 // pred_region
      %78 = dma.done [#allocation9], 2048
    $region41: #{tpu_custom_call.1} parent=1 // pred_fallthru
      _
    %v79 = vld [vmem:[#allocation2] sm:$0xff]
    %v80 = vld [vmem:[#allocation2 + $0x8] sm:$0xff]
    %v81 = vld [vmem:[#allocation5] sm:$0xff]
    %v82 = vld [vmem:[#allocation5 + $0x8] sm:$0xff]
    %vm83 = vcmask 130048
    %v85 = vsel %vm83, %v79, 0
    %v88 = vsel %vm83, %v80, 0
    %90 = vmatprep.subr.mxu0 0.0
    %91 = vmatpush1.msra.mxu0 %v81
    %92 = vmatprep.subr.mxu0 0.0
    %93 = vmatpush1.msra.mxu0 %v82
    %94 = vmatprep.subr.mxu0 0.0
    %95 = vmatpush1.msra.mxu0 0.0
    %96 = vmatprep.subr.mxu0 0.0
    %97 = vmatpush1.msra.mxu0 0.0
    %98 = vmatprep.subr.mxu0 0.0
    %99 = vmatpush1.msra.mxu0 0.0
    %100 = vmatprep.subr.mxu0 0.0
    %101 = vmatpush1.msra.mxu0 0.0
    %102 = vmatprep.subr.mxu0 0.0
    %103 = vmatpush1.msra.mxu0 0.0
    %104 = vmatprep.subr.mxu0 0.0
    %105 = vmatpush1.msra.mxu0 0.0
    %106 = vmatprep.subr.mxu0 0.0
    %107 = vmatpush1.msra.mxu0 0.0
    %108 = vmatprep.subr.mxu0 0.0
    %109 = vmatpush1.msra.mxu0 0.0
    %110 = vmatprep.subr.mxu0 0.0
    %111 = vmatpush1.msra.mxu0 0.0
    %112 = vmatprep.subr.mxu0 0.0
    %113 = vmatpush1.msra.mxu0 0.0
    %114 = vmatprep.subr.mxu0 0.0
    %115 = vmatpush1.msra.mxu0 0.0
    %116 = vmatprep.subr.mxu0 0.0
    %117 = vmatpush1.msra.mxu0 0.0
    %118 = vmatprep.subr.mxu0 0.0
    %119 = vmatpush1.msra.mxu0 0.0
    %120 = vmatprep.subr.mxu0 0.0
    %121 = vmatpush1.msra.mxu0 0.0
    %122 = vmatprep.subr.mxu0 0.0
    %123 = vmatpush1.msra.mxu0 0.0
    %124 = vmatprep.subr.mxu0 0.0
    %125 = vmatpush1.msra.mxu0 0.0
    %126 = vmatprep.subr.mxu0 0.0
    %127 = vmatpush1.msra.mxu0 0.0
    %128 = vmatprep.subr.mxu0 0.0
    %129 = vmatpush1.msra.mxu0 0.0
    %130 = vmatprep.subr.mxu0 0.0
    %131 = vmatpush1.msra.mxu0 0.0
    %132 = vmatprep.subr.mxu0 0.0
    %133 = vmatpush1.msra.mxu0 0.0
    %134 = vmatprep.subr.mxu0 0.0
    %135 = vmatpush1.msra.mxu0 0.0
    %136 = vmatprep.subr.mxu0 0.0
    %137 = vmatpush1.msra.mxu0 0.0
    %138 = vmatprep.subr.mxu0 0.0
    %139 = vmatpush1.msra.mxu0 0.0
    %140 = vmatprep.subr.mxu0 0.0
    %141 = vmatpush1.msra.mxu0 0.0
    %142 = vmatprep.subr.mxu0 0.0
    %143 = vmatpush1.msra.mxu0 0.0
    %144 = vmatprep.subr.mxu0 0.0
    %145 = vmatpush1.msra.mxu0 0.0
    %146 = vmatprep.subr.mxu0 0.0
    %147 = vmatpush1.msra.mxu0 0.0
    %148 = vmatprep.subr.mxu0 0.0
    %149 = vmatpush1.msra.mxu0 0.0
    %150 = vmatprep.subr.mxu0 0.0
    %151 = vmatpush1.msra.mxu0 0.0
    %152 = vmatprep.subr.mxu0 0.0
    %153 = vmatpush1.msra.mxu0 0.0
    %154 = vmatprep.mubr.f32.mxu0 0.0
    %155 = vmatmul.mubr.f32.gmra.mrb[0].mxu0 %v85
    %v156 = vpop.f32.mrb[0].mxu0
    %v157 = vadd.f32 0.0, %v156
    %v158 = vpop.f32.mrb[0].mxu0
    %159 = vmatprep.mubr.f32.mxu0 0.0
    %160 = vmatmul.mubr.f32.gmra.mrb[0].mxu0 %v88
    %v161 = vpop.f32.mrb[0].mxu0
    %v162 = vadd.f32 0.0, %v161
    %v163 = vpop.f32.mrb[0].mxu0
    %164 = vdwg.mxu0
    %v165 = vsub.f32 %v81, %v157
    %v166 = vsub.f32 %v82, %v162
    %v167 = vld [vmem:[#allocation7] sm:$0xff]
    %v168 = vld [vmem:[#allocation7 + $0x8] sm:$0xff]
    %v169 = vld [vmem:[#allocation7 + $0x10] sm:$0xff]
    %v170 = vld [vmem:[#allocation7 + $0x18] sm:$0xff]
    %v171 = vld [vmem:[#allocation7 + $0x20] sm:$0xff]
    %v172 = vld [vmem:[#allocation7 + $0x28] sm:$0xff]
    %v173 = vld [vmem:[#allocation7 + $0x30] sm:$0xff]
    %v174 = vld [vmem:[#allocation7 + $0x38] sm:$0xff]
    %v175 = vld [vmem:[#allocation7 + $0x40] sm:$0xff]
    %v176 = vld [vmem:[#allocation7 + $0x48] sm:$0xff]
    %v177 = vld [vmem:[#allocation7 + $0x50] sm:$0xff]
    %v178 = vld [vmem:[#allocation7 + $0x58] sm:$0xff]
    %v179 = vld [vmem:[#allocation7 + $0x60] sm:$0xff]
    %v180 = vld [vmem:[#allocation7 + $0x68] sm:$0xff]
    %v181 = vld [vmem:[#allocation7 + $0x70] sm:$0xff]
    %v182 = vld [vmem:[#allocation7 + $0x78] sm:$0xff]
    %v183 = vld [vmem:[%s3] sm:$0x1]
    %v185 = vlaneseq
    %v186 = vshrl.u32 %v185, 7
    %v187 = vsub.s32 0, %v186
    %v188 = vrot.slane %v183, %v187
    %190 = vmatprep.subr.mxu0 0.0
    %191 = vmatpush1.msra.mxu0 %v167
    %192 = vmatprep.subr.mxu0 0.0
    %193 = vmatpush1.msra.mxu0 %v168
    %194 = vmatprep.subr.mxu0 0.0
    %195 = vmatpush1.msra.mxu0 %v169
    %196 = vmatprep.subr.mxu0 0.0
    %197 = vmatpush1.msra.mxu0 %v170
    %198 = vmatprep.subr.mxu0 0.0
    %199 = vmatpush1.msra.mxu0 %v171
    %200 = vmatprep.subr.mxu0 0.0
    %201 = vmatpush1.msra.mxu0 %v172
    %202 = vmatprep.subr.mxu0 0.0
    %203 = vmatpush1.msra.mxu0 %v173
    %204 = vmatprep.subr.mxu0 0.0
    %205 = vmatpush1.msra.mxu0 %v174
    %206 = vmatprep.subr.mxu0 0.0
    %207 = vmatpush1.msra.mxu0 %v175
    %208 = vmatprep.subr.mxu0 0.0
    %209 = vmatpush1.msra.mxu0 %v176
    %210 = vmatprep.subr.mxu0 0.0
    %211 = vmatpush1.msra.mxu0 %v177
    %212 = vmatprep.subr.mxu0 0.0
    %213 = vmatpush1.msra.mxu0 %v178
    %214 = vmatprep.subr.mxu0 0.0
    %215 = vmatpush1.msra.mxu0 %v179
    %216 = vmatprep.subr.mxu0 0.0
    %217 = vmatpush1.msra.mxu0 %v180
    %218 = vmatprep.subr.mxu0 0.0
    %219 = vmatpush1.msra.mxu0 %v181
    %220 = vmatprep.subr.mxu0 0.0
    %221 = vmatpush1.msra.mxu0 %v182
    %222 = vmatprep.subr.mxu0 0.0
    %223 = vmatpush1.msra.mxu0 0.0
    %224 = vmatprep.subr.mxu0 0.0
    %225 = vmatpush1.msra.mxu0 0.0
    %226 = vmatprep.subr.mxu0 0.0
    %227 = vmatpush1.msra.mxu0 0.0
    %228 = vmatprep.subr.mxu0 0.0
    %229 = vmatpush1.msra.mxu0 0.0
    %230 = vmatprep.subr.mxu0 0.0
    %231 = vmatpush1.msra.mxu0 0.0
    %232 = vmatprep.subr.mxu0 0.0
    %233 = vmatpush1.msra.mxu0 0.0
    %234 = vmatprep.subr.mxu0 0.0
    %235 = vmatpush1.msra.mxu0 0.0
    %236 = vmatprep.subr.mxu0 0.0
    %237 = vmatpush1.msra.mxu0 0.0
    %238 = vmatprep.subr.mxu0 0.0
    %239 = vmatpush1.msra.mxu0 0.0
    %240 = vmatprep.subr.mxu0 0.0
    %241 = vmatpush1.msra.mxu0 0.0
    %242 = vmatprep.subr.mxu0 0.0
    %243 = vmatpush1.msra.mxu0 0.0
    %244 = vmatprep.subr.mxu0 0.0
    %245 = vmatpush1.msra.mxu0 0.0
    %246 = vmatprep.subr.mxu0 0.0
    %247 = vmatpush1.msra.mxu0 0.0
    %248 = vmatprep.subr.mxu0 0.0
    %249 = vmatpush1.msra.mxu0 0.0
    %250 = vmatprep.subr.mxu0 0.0
    %251 = vmatpush1.msra.mxu0 0.0
    %252 = vmatprep.subr.mxu0 0.0
    %253 = vmatpush1.msra.mxu0 0.0
    %254 = vmatprep.mubr.f32.mxu0 0.0
    %255 = vmatmul.mubr.f32.gmra.mrb[0].mxu0 %v165
    %v256 = vpop.f32.mrb[0].mxu0
    %v257 = vadd.f32 %v188, %v256
    %v258 = vpop.f32.mrb[0].mxu0
    %259 = vmatprep.mubr.f32.mxu0 0.0
    %260 = vmatmul.mubr.f32.gmra.mrb[0].mxu0 %v166
    %v261 = vpop.f32.mrb[0].mxu0
    %v262 = vadd.f32 %v188, %v261
    %v263 = vpop.f32.mrb[0].mxu0
    %264 = vdwg.mxu0
    %v265 = vmax.f32 %v257, 0.0
    %v266 = vmax.f32 %v262, 0.0
    %267 = vmatprep.subr.mxu0 0.0
    %268 = vmatpush1.msra.mxu0 %v265
    %269 = vmatprep.subr.mxu0 0.0
    %270 = vmatpush1.msra.mxu0 %v266
    %271 = vmatprep.subr.mxu0 0.0
    %272 = vmatpush1.msra.mxu0 0.0
    %273 = vmatprep.subr.mxu0 0.0
    %274 = vmatpush1.msra.mxu0 0.0
    %275 = vmatprep.subr.mxu0 0.0
    %276 = vmatpush1.msra.mxu0 0.0
    %277 = vmatprep.subr.mxu0 0.0
    %278 = vmatpush1.msra.mxu0 0.0
    %279 = vmatprep.subr.mxu0 0.0
    %280 = vmatpush1.msra.mxu0 0.0
    %281 = vmatprep.subr.mxu0 0.0
    %282 = vmatpush1.msra.mxu0 0.0
    %283 = vmatprep.subr.mxu0 0.0
    %284 = vmatpush1.msra.mxu0 0.0
    %285 = vmatprep.subr.mxu0 0.0
    %286 = vmatpush1.msra.mxu0 0.0
    %287 = vmatprep.subr.mxu0 0.0
    %288 = vmatpush1.msra.mxu0 0.0
    %289 = vmatprep.subr.mxu0 0.0
    %290 = vmatpush1.msra.mxu0 0.0
    %291 = vmatprep.subr.mxu0 0.0
    %292 = vmatpush1.msra.mxu0 0.0
    %293 = vmatprep.subr.mxu0 0.0
    %294 = vmatpush1.msra.mxu0 0.0
    %295 = vmatprep.subr.mxu0 0.0
    %296 = vmatpush1.msra.mxu0 0.0
    %297 = vmatprep.subr.mxu0 0.0
    %298 = vmatpush1.msra.mxu0 0.0
    %299 = vmatprep.subr.mxu0 0.0
    %300 = vmatpush1.msra.mxu0 0.0
    %301 = vmatprep.subr.mxu0 0.0
    %302 = vmatpush1.msra.mxu0 0.0
    %303 = vmatprep.subr.mxu0 0.0
    %304 = vmatpush1.msra.mxu0 0.0
    %305 = vmatprep.subr.mxu0 0.0
    %306 = vmatpush1.msra.mxu0 0.0
    %307 = vmatprep.subr.mxu0 0.0
    %308 = vmatpush1.msra.mxu0 0.0
    %309 = vmatprep.subr.mxu0 0.0
    %310 = vmatpush1.msra.mxu0 0.0
    %311 = vmatprep.subr.mxu0 0.0
    %312 = vmatpush1.msra.mxu0 0.0
    %313 = vmatprep.subr.mxu0 0.0
    %314 = vmatpush1.msra.mxu0 0.0
    %315 = vmatprep.subr.mxu0 0.0
    %316 = vmatpush1.msra.mxu0 0.0
    %317 = vmatprep.subr.mxu0 0.0
    %318 = vmatpush1.msra.mxu0 0.0
    %319 = vmatprep.subr.mxu0 0.0
    %320 = vmatpush1.msra.mxu0 0.0
    %321 = vmatprep.subr.mxu0 0.0
    %322 = vmatpush1.msra.mxu0 0.0
    %323 = vmatprep.subr.mxu0 0.0
    %324 = vmatpush1.msra.mxu0 0.0
    %325 = vmatprep.subr.mxu0 0.0
    %326 = vmatpush1.msra.mxu0 0.0
    %327 = vmatprep.subr.mxu0 0.0
    %328 = vmatpush1.msra.mxu0 0.0
    %329 = vmatprep.subr.mxu0 0.0
    %330 = vmatpush1.msra.mxu0 0.0
    %331 = vmatprep.mubr.f32.mxu0 0.0
    %332 = vmatmul.mubr.f32.gmra.mrb[0].mxu0 %v85
    %v333 = vpop.f32.mrb[0].mxu0
    %v334 = vadd.f32 0.0, %v333
    %v335 = vpop.f32.mrb[0].mxu0
    %336 = vmatprep.mubr.f32.mxu0 0.0
    %337 = vmatmul.mubr.f32.gmra.mrb[0].mxu0 %v88
    %v338 = vpop.f32.mrb[0].mxu0
    %v339 = vadd.f32 0.0, %v338
    %v340 = vpop.f32.mrb[0].mxu0
    %341 = vdwg.mxu0
    %v342 = vsub.f32 %v265, %v334
    %v343 = vsub.f32 %v266, %v339
    %v344 = vld [vmem:[#allocation8] sm:$0xff]
    %v345 = vld [vmem:[#allocation8 + $0x8] sm:$0xff]
    %v346 = vld [vmem:[#allocation8 + $0x10] sm:$0xff]
    %v347 = vld [vmem:[#allocation8 + $0x18] sm:$0xff]
    %v348 = vld [vmem:[#allocation8 + $0x20] sm:$0xff]
    %v349 = vld [vmem:[#allocation8 + $0x28] sm:$0xff]
    %v350 = vld [vmem:[#allocation8 + $0x30] sm:$0xff]
    %v351 = vld [vmem:[#allocation8 + $0x38] sm:$0xff]
    %v352 = vld [vmem:[#allocation8 + $0x40] sm:$0xff]
    %v353 = vld [vmem:[#allocation8 + $0x48] sm:$0xff]
    %v354 = vld [vmem:[#allocation8 + $0x50] sm:$0xff]
    %v355 = vld [vmem:[#allocation8 + $0x58] sm:$0xff]
    %v356 = vld [vmem:[#allocation8 + $0x60] sm:$0xff]
    %v357 = vld [vmem:[#allocation8 + $0x68] sm:$0xff]
    %v358 = vld [vmem:[#allocation8 + $0x70] sm:$0xff]
    %v359 = vld [vmem:[#allocation8 + $0x78] sm:$0xff]
    %v360 = vld [vmem:[%s5] sm:$0x1]
    %v362 = vlaneseq
    %v363 = vshrl.u32 %v362, 7
    %v364 = vsub.s32 0, %v363
    %v365 = vrot.slane %v360, %v364
    %367 = vmatprep.subr.mxu0 0.0
    %368 = vmatpush1.msra.mxu0 %v344
    %369 = vmatprep.subr.mxu0 0.0
    %370 = vmatpush1.msra.mxu0 %v345
    %371 = vmatprep.subr.mxu0 0.0
    %372 = vmatpush1.msra.mxu0 %v346
    %373 = vmatprep.subr.mxu0 0.0
    %374 = vmatpush1.msra.mxu0 %v347
    %375 = vmatprep.subr.mxu0 0.0
    %376 = vmatpush1.msra.mxu0 %v348
    %377 = vmatprep.subr.mxu0 0.0
    %378 = vmatpush1.msra.mxu0 %v349
    %379 = vmatprep.subr.mxu0 0.0
    %380 = vmatpush1.msra.mxu0 %v350
    %381 = vmatprep.subr.mxu0 0.0
    %382 = vmatpush1.msra.mxu0 %v351
    %383 = vmatprep.subr.mxu0 0.0
    %384 = vmatpush1.msra.mxu0 %v352
    %385 = vmatprep.subr.mxu0 0.0
    %386 = vmatpush1.msra.mxu0 %v353
    %387 = vmatprep.subr.mxu0 0.0
    %388 = vmatpush1.msra.mxu0 %v354
    %389 = vmatprep.subr.mxu0 0.0
    %390 = vmatpush1.msra.mxu0 %v355
    %391 = vmatprep.subr.mxu0 0.0
    %392 = vmatpush1.msra.mxu0 %v356
    %393 = vmatprep.subr.mxu0 0.0
    %394 = vmatpush1.msra.mxu0 %v357
    %395 = vmatprep.subr.mxu0 0.0
    %396 = vmatpush1.msra.mxu0 %v358
    %397 = vmatprep.subr.mxu0 0.0
    %398 = vmatpush1.msra.mxu0 %v359
    %399 = vmatprep.subr.mxu0 0.0
    %400 = vmatpush1.msra.mxu0 0.0
    %401 = vmatprep.subr.mxu0 0.0
    %402 = vmatpush1.msra.mxu0 0.0
    %403 = vmatprep.subr.mxu0 0.0
    %404 = vmatpush1.msra.mxu0 0.0
    %405 = vmatprep.subr.mxu0 0.0
    %406 = vmatpush1.msra.mxu0 0.0
    %407 = vmatprep.subr.mxu0 0.0
    %408 = vmatpush1.msra.mxu0 0.0
    %409 = vmatprep.subr.mxu0 0.0
    %410 = vmatpush1.msra.mxu0 0.0
    %411 = vmatprep.subr.mxu0 0.0
    %412 = vmatpush1.msra.mxu0 0.0
    %413 = vmatprep.subr.mxu0 0.0
    %414 = vmatpush1.msra.mxu0 0.0
    %415 = vmatprep.subr.mxu0 0.0
    %416 = vmatpush1.msra.mxu0 0.0
    %417 = vmatprep.subr.mxu0 0.0
    %418 = vmatpush1.msra.mxu0 0.0
    %419 = vmatprep.subr.mxu0 0.0
    %420 = vmatpush1.msra.mxu0 0.0
    %421 = vmatprep.subr.mxu0 0.0
    %422 = vmatpush1.msra.mxu0 0.0
    %423 = vmatprep.subr.mxu0 0.0
    %424 = vmatpush1.msra.mxu0 0.0
    %425 = vmatprep.subr.mxu0 0.0
    %426 = vmatpush1.msra.mxu0 0.0
    %427 = vmatprep.subr.mxu0 0.0
    %428 = vmatpush1.msra.mxu0 0.0
    %429 = vmatprep.subr.mxu0 0.0
    %430 = vmatpush1.msra.mxu0 0.0
    %431 = vmatprep.mubr.f32.mxu0 0.0
    %432 = vmatmul.mubr.f32.gmra.mrb[0].mxu0 %v342
    %v433 = vpop.f32.mrb[0].mxu0
    %v434 = vadd.f32 %v365, %v433
    %v435 = vpop.f32.mrb[0].mxu0
    %436 = vmatprep.mubr.f32.mxu0 0.0
    %437 = vmatmul.mubr.f32.gmra.mrb[0].mxu0 %v343
    %v438 = vpop.f32.mrb[0].mxu0
    %v439 = vadd.f32 %v365, %v438
    %v440 = vpop.f32.mrb[0].mxu0
    %441 = vdwg.mxu0
    %v442 = vmax.f32 %v434, 0.0
    %v443 = vmax.f32 %v439, 0.0
    %444 = vst [vmem:[#allocation10] sm:$0xff] %v442
    %445 = vst [vmem:[#allocation10 + $0x8] sm:$0xff] %v443
    // Predicated region
    $region42: #{tpu_custom_call.1} parent=1 // pred_check
      _
    $region43: #{tpu_custom_call.1} parent=1 // pred_check_branch
      %447 = sbr.rel (0) target = $region45
    $region44: #{tpu_custom_call.1} parent=1 // pred_region
      %s449 = ssub.s32 256, 256
      %450 = vsyncadd [#allocation4], %s449
      %s451 = sshll.u32 [#allocation10], 4
      %s452 = int_to_ptr.vmem [resolvable:$true] %s451
      %457 = dma.vmem_to_hbm [thread:$0]  %s452, 256, %s6, [#allocation4], 128, 128, 8
    $region45: #{tpu_custom_call.1} parent=1 // pred_fallthru
      _
    // Predicated region
    $region46: #{tpu_custom_call.1} parent=1 // pred_check
      _
    $region47: #{tpu_custom_call.1} parent=1 // pred_check_branch
      %459 = sbr.rel (0) target = $region49
    $region48: #{tpu_custom_call.1} parent=1 // pred_region
      %460 = dma.done [#allocation4], 256
    $region49: #{tpu_custom_call.1} parent=1 // pred_fallthru
      _
    %461 = vsyncpa [#allocation3], 1
    %462 = vsyncpa [#allocation6], 1
    %463 = vsyncpa [#allocation9], 1
    %464 = vsyncpa [#allocation4], 1

</llo_original>
